<compile_context>
chip_gen: v6e
topology: v6e:2x2x1
jax: 0.10.0
libtpu: 0.0.40
codegen_flags: <defaults>
</compile_context>

<pallas_src>
import functools

import jax
import jax.numpy as jnp
from jax import lax
from jax.experimental import pallas as pl
from jax.experimental.pallas import tpu as pltpu


def _round_up(a, b):
    return ((a + b - 1) // b) * b


def _min_sublanes(dtype):
    # Dtype-dependent minimum sublane tile: 8 for 4-byte, 16 for 2-byte,
    # 32 for 1-byte dtypes.
    itemsize = int(jnp.dtype(dtype).itemsize)
    return max(8, 32 // max(itemsize, 1))


def _soft_dice_kernel(x_ref, y_ref, dc_ref, tp_acc, sxy_acc, *,
                      smooth, n_chunks, tk, red, ragged_k, unroll):
    """Grid = (row_tiles, k_tiles); k (reduction over H*W) is the last axis."""
    k = pl.program_id(1)

    @pl.when(k == 0)
    def _init():
        tp_acc[...] = jnp.zeros_like(tp_acc)
        sxy_acc[...] = jnp.zeros_like(sxy_acc)

    rows = tp_acc.shape[0]
    if ragged_k:
        # Hoisted out of the chunk loop (JAX does not CSE broadcast_in_dim).
        lane_idx = lax.broadcasted_iota(jnp.int32, (rows, 128), 1)
        k_base = k * tk

    def body(c, carry):
        off = pl.multiple_of(c * 128, 128)
        xs = x_ref[:, pl.ds(off, 128)].astype(jnp.float32)
        ys = y_ref[:, pl.ds(off, 128)].astype(jnp.float32)
        if ragged_k:
            # Zero out lanes past the true reduction length.  Only the final
            # k tile is ragged; for all other chunks rem >= 128 (mask all-true)
            # and the selects are cheap VPU filler on an HBM-bound kernel.
            rem = (red - k_base) - c * 128
            m = lane_idx < rem
            xs = jnp.where(m, xs, 0.0)
            ys = jnp.where(m, ys, 0.0)
        # 128-lane-wide partial sums: VPU adds only; the single cross-lane
        # (XLU) reduction is deferred to the finalize block.
        tp_acc[...] += xs * ys
        sxy_acc[...] += xs + ys
        return carry

    lax.fori_loop(0, n_chunks, body, 0, unroll=unroll)

    @pl.when(k == pl.num_programs(1) - 1)
    def _finalize():
        tp = jnp.sum(tp_acc[...], axis=-1, keepdims=True)     # (rows, 1)
        sxy = jnp.sum(sxy_acc[...], axis=-1, keepdims=True)   # sum(x)+sum(y)
        # fp + fn = sum(x) + sum(y) - 2*tp  =>  denominator = sum(x)+sum(y)+smooth
        dc = (2.0 * tp + smooth) / (sxy + smooth)
        # Lane-dense store (avoids masked vst / thin writeback).
        dc_ref[...] = jnp.broadcast_to(dc, dc_ref.shape)


def soft_dice_loss(x, y, *, smooth=1.0):
    """Pallas implementation of SoftDiceLoss(smooth=smooth, dims=(-2, -1))."""
    assert x.shape == y.shape
    assert x.ndim >= 2

    lead = 1
    for d in x.shape[:-2]:
        lead *= int(d)
    lead = max(lead, 1)
    red = int(x.shape[-2]) * int(x.shape[-1])

    # Keep native dtype through HBM; the kernel upcasts to f32 internally.
    x2 = jnp.reshape(x, (lead, red))
    y2 = jnp.reshape(y, (lead, red))

    itemsize = int(jnp.dtype(x.dtype).itemsize)
    sub = _min_sublanes(x.dtype)

    # Row tile: multiple of the dtype sublane minimum, <= 128 rows.  When the
    # row count allows it, target >= 2 row tiles so the "parallel" grid axis
    # can be sharded across both TensorCores on v7x (no effect on v5e/v6e).
    if lead > sub:
        bc_tile = min(128, _round_up(pl.cdiv(lead, 2), sub))
    else:
        bc_tile = sub
    n_row_tiles = pl.cdiv(lead, bc_tile)

    # Reduction tile: as wide as possible (multiple of 128, <= 8192) while
    # keeping 2 inputs x 2 pipeline buffers <= 16 MiB of VMEM.  With the
    # explicit 32 MiB scoped-VMEM limit below this fits v5e/v6e (128 MiB
    # physical) and v7x (64 MiB physical) with headroom.
    in_buffer_budget = 16 * 1024 * 1024
    tk_cap = max(128, (in_buffer_budget // (4 * bc_tile * itemsize)) // 128 * 128)
    tk = min(8192, _round_up(red, 128), tk_cap)
    n_k_tiles = pl.cdiv(red, tk)
    n_chunks = tk // 128
    ragged_k = (red % tk) != 0

    # Bounded unroll that divides the chunk count (keeps LLO visibility
    # without vreg spills).
    unroll = 1
    for u in (8, 4, 2):
        if n_chunks % u == 0:
            unroll = u
            break

    kernel = functools.partial(
        _soft_dice_kernel,
        smooth=float(smooth),
        n_chunks=n_chunks,
        tk=tk,
        red=red,
        ragged_k=ragged_k,
        unroll=unroll,
    )

    cost = pl.CostEstimate(
        flops=4 * lead * red,
        transcendentals=0,
        bytes_accessed=2 * lead * red * itemsize + lead * 128 * 4,
    )

    dc = pl.pallas_call(
        kernel,
        out_shape=jax.ShapeDtypeStruct((lead, 128), jnp.float32),
        grid_spec=pltpu.PrefetchScalarGridSpec(
            num_scalar_prefetch=0,
            grid=(n_row_tiles, n_k_tiles),
            in_specs=[
                pl.BlockSpec((bc_tile, tk), lambda r, k: (r, k)),
                pl.BlockSpec((bc_tile, tk), lambda r, k: (r, k)),
            ],
            out_specs=pl.BlockSpec((bc_tile, 128), lambda r, k: (r, 0)),
            scratch_shapes=[
                pltpu.VMEM((bc_tile, 128), jnp.float32),  # tp partial sums
                pltpu.VMEM((bc_tile, 128), jnp.float32),  # sum(x)+sum(y) partials
            ],
        ),
        compiler_params=pltpu.CompilerParams(
            dimension_semantics=("parallel", "arbitrary"),
            vmem_limit_bytes=32 * 1024 * 1024,
        ),
        cost_estimate=cost,
    )(x2, y2)

    # Tiny epilogue in plain JAX: take the per-row dc (column 0), mean, 1 - mean.
    return 1.0 - jnp.mean(dc[:, 0])


def soft_dice_loss_ref(x, y, *, smooth=1.0):
    """Pure-JAX reference matching the PyTorch module."""
    xf = x.astype(jnp.float32)
    yf = y.astype(jnp.float32)
    tp = jnp.sum(xf * yf, axis=(-2, -1))
    fp = jnp.sum(xf * (1.0 - yf), axis=(-2, -1))
    fn = jnp.sum((1.0 - xf) * yf, axis=(-2, -1))
    dc = (2.0 * tp + smooth) / (2.0 * tp + fp + fn + smooth)
    return 1.0 - jnp.mean(dc)


if __name__ == "__main__":
    key = jax.random.PRNGKey(0)

    # Case 1: nicely aligned shapes (no masking / boundary path).
    kx, ky, key = jax.random.split(key, 3)
    B, C, H, W = 2, 4, 16, 16
    x = jax.random.uniform(kx, (B, C, H, W), dtype=jnp.float32)
    y = (jax.random.uniform(ky, (B, C, H, W), dtype=jnp.float32) > 0.5).astype(
        jnp.float32
    )
    loss = jax.block_until_ready(soft_dice_loss(x, y, smooth=1.0))
    ref = jax.block_until_ready(soft_dice_loss_ref(x, y, smooth=1.0))
    assert jnp.allclose(loss, ref, rtol=1e-5, atol=1e-5), (loss, ref)

    # Case 2: unaligned shapes (exercises in-kernel lane mask + ragged row tile).
    kx2, ky2, key = jax.random.split(key, 3)
    B2, C2, H2, W2 = 2, 3, 10, 10
    x2 = jax.random.uniform(kx2, (B2, C2, H2, W2), dtype=jnp.float32)
    y2 = (jax.random.uniform(ky2, (B2, C2, H2, W2), dtype=jnp.float32) > 0.5).astype(
        jnp.float32
    )
    loss2 = jax.block_until_ready(soft_dice_loss(x2, y2, smooth=1.0))
    ref2 = jax.block_until_ready(soft_dice_loss_ref(x2, y2, smooth=1.0))
    assert jnp.allclose(loss2, ref2, rtol=1e-5, atol=1e-5), (loss2, ref2)

    # Case 3: two row tiles on the "parallel" axis (lead=16 -> bc_tile=8 x 2).
    kx3, ky3, key = jax.random.split(key, 3)
    B3, C3, H3, W3 = 4, 4, 16, 16
    x3 = jax.random.uniform(kx3, (B3, C3, H3, W3), dtype=jnp.float32)
    y3 = (jax.random.uniform(ky3, (B3, C3, H3, W3), dtype=jnp.float32) > 0.5).astype(
        jnp.float32
    )
    loss3 = jax.block_until_ready(soft_dice_loss(x3, y3, smooth=1.0))
    ref3 = jax.block_until_ready(soft_dice_loss_ref(x3, y3, smooth=1.0))
    assert jnp.allclose(loss3, ref3, rtol=1e-5, atol=1e-5), (loss3, ref3)

    # Case 4: bf16 inputs (exercises the 16-row sublane minimum + in-kernel upcast).
    kx4, ky4, key = jax.random.split(key, 3)
    B4, C4, H4, W4 = 2, 8, 32, 32
    x4 = jax.random.uniform(kx4, (B4, C4, H4, W4), dtype=jnp.float32).astype(jnp.bfloat16)
    y4 = (jax.random.uniform(ky4, (B4, C4, H4, W4), dtype=jnp.float32) > 0.5).astype(
        jnp.bfloat16
    )
    loss4 = jax.block_until_ready(soft_dice_loss(x4, y4, smooth=1.0))
    ref4 = jax.block_until_ready(soft_dice_loss_ref(x4, y4, smooth=1.0))
    assert jnp.allclose(loss4, ref4, rtol=1e-3, atol=1e-3), (loss4, ref4)

    print("KERNEL_OK")
</pallas_src>

<mosaic_0001>
module attributes {stable_mosaic.version = 11 : i64} {
  func.func @_soft_dice_kernel(%arg0: i32, %arg1: i32, %arg2: memref<8x256xf32, #tpu.memory_space<vmem>>, %arg3: memref<8x256xf32, #tpu.memory_space<vmem>>, %arg4: memref<8x128xf32, #tpu.memory_space<vmem>>, %arg5: memref<8x128xf32, #tpu.memory_space<vmem>>, %arg6: memref<8x128xf32, #tpu.memory_space<vmem>>) attributes {dimension_semantics = [#tpu.dimension_semantics<parallel>, #tpu.dimension_semantics<arbitrary>], iteration_bounds = array<i64: 1, 1>, scalar_prefetch = 0 : i64, scratch_operands = 2 : i64, tpu.core_type = #tpu.core_type<tc>, window_params = [{transform_indices = @transform_0, window_bounds = array<i64: 8, 256>}, {transform_indices = @transform_1, window_bounds = array<i64: 8, 256>}, {transform_indices = @transform_2, window_bounds = array<i64: 8, 128>}]} {
    %c0_i32 = arith.constant 0 : i32
    %0 = arith.cmpi eq, %arg1, %c0_i32 : i32
    %1 = arith.extui %0 : i1 to i32
    %c0_i32_0 = arith.constant 0 : i32
    %2 = arith.cmpi ne, %1, %c0_i32_0 : i32
    scf.if %2 {
      %cst = arith.constant 0.000000e+00 : f32
      %34 = vector.broadcast %cst : f32 to vector<8x128xf32>
      %c0_24 = arith.constant 0 : index
      %c0_25 = arith.constant 0 : index
      %35 = vector.load %arg5[%c0_24, %c0_25] : memref<8x128xf32, #tpu.memory_space<vmem>>, vector<8x128xf32>
      tpu.vector_store %arg5[%c0_24, %c0_25], %34 {strides = array<i32>} : memref<8x128xf32, #tpu.memory_space<vmem>>, vector<8x128xf32>,
      %cst_26 = arith.constant 0.000000e+00 : f32
      %36 = vector.broadcast %cst_26 : f32 to vector<8x128xf32>
      %c0_27 = arith.constant 0 : index
      %c0_28 = arith.constant 0 : index
      %37 = vector.load %arg6[%c0_27, %c0_28] : memref<8x128xf32, #tpu.memory_space<vmem>>, vector<8x128xf32>
      tpu.vector_store %arg6[%c0_27, %c0_28], %36 {strides = array<i32>} : memref<8x128xf32, #tpu.memory_space<vmem>>, vector<8x128xf32>,
    } else {
    }
    %c0_i32_1 = arith.constant 0 : i32
    %c128_i32 = arith.constant 128 : i32
    %3 = arith.muli %c0_i32_1, %c128_i32 : i32
    %4 = tpu.assume_multiple %3, 128 : i32
    %c0 = arith.constant 0 : index
    %5 = arith.index_cast %4 : i32 to index
    %6 = vector.load %arg2[%c0, %5] : memref<8x256xf32, #tpu.memory_space<vmem>>, vector<8x128xf32>
    %c0_2 = arith.constant 0 : index
    %7 = arith.index_cast %4 : i32 to index
    %8 = vector.load %arg3[%c0_2, %7] : memref<8x256xf32, #tpu.memory_space<vmem>>, vector<8x128xf32>
    %c0_3 = arith.constant 0 : index
    %c0_4 = arith.constant 0 : index
    %9 = vector.load %arg5[%c0_3, %c0_4] : memref<8x128xf32, #tpu.memory_space<vmem>>, vector<8x128xf32>
    %10 = arith.mulf %6, %8 : vector<8x128xf32>
    %11 = arith.addf %9, %10 : vector<8x128xf32>
    %c0_5 = arith.constant 0 : index
    %c0_6 = arith.constant 0 : index
    %12 = vector.load %arg5[%c0_5, %c0_6] : memref<8x128xf32, #tpu.memory_space<vmem>>, vector<8x128xf32>
    tpu.vector_store %arg5[%c0_5, %c0_6], %11 {strides = array<i32>} : memref<8x128xf32, #tpu.memory_space<vmem>>, vector<8x128xf32>,
    %c0_7 = arith.constant 0 : index
    %c0_8 = arith.constant 0 : index
    %13 = vector.load %arg6[%c0_7, %c0_8] : memref<8x128xf32, #tpu.memory_space<vmem>>, vector<8x128xf32>
    %14 = arith.addf %6, %8 : vector<8x128xf32>
    %15 = arith.addf %13, %14 : vector<8x128xf32>
    %c0_9 = arith.constant 0 : index
    %c0_10 = arith.constant 0 : index
    %16 = vector.load %arg6[%c0_9, %c0_10] : memref<8x128xf32, #tpu.memory_space<vmem>>, vector<8x128xf32>
    tpu.vector_store %arg6[%c0_9, %c0_10], %15 {strides = array<i32>} : memref<8x128xf32, #tpu.memory_space<vmem>>, vector<8x128xf32>,
    %c1_i32 = arith.constant 1 : i32
    %c128_i32_11 = arith.constant 128 : i32
    %17 = arith.muli %c1_i32, %c128_i32_11 : i32
    %18 = tpu.assume_multiple %17, 128 : i32
    %c0_12 = arith.constant 0 : index
    %19 = arith.index_cast %18 : i32 to index
    %20 = vector.load %arg2[%c0_12, %19] : memref<8x256xf32, #tpu.memory_space<vmem>>, vector<8x128xf32>
    %c0_13 = arith.constant 0 : index
    %21 = arith.index_cast %18 : i32 to index
    %22 = vector.load %arg3[%c0_13, %21] : memref<8x256xf32, #tpu.memory_space<vmem>>, vector<8x128xf32>
    %c0_14 = arith.constant 0 : index
    %c0_15 = arith.constant 0 : index
    %23 = vector.load %arg5[%c0_14, %c0_15] : memref<8x128xf32, #tpu.memory_space<vmem>>, vector<8x128xf32>
    %24 = arith.mulf %20, %22 : vector<8x128xf32>
    %25 = arith.addf %23, %24 : vector<8x128xf32>
    %c0_16 = arith.constant 0 : index
    %c0_17 = arith.constant 0 : index
    %26 = vector.load %arg5[%c0_16, %c0_17] : memref<8x128xf32, #tpu.memory_space<vmem>>, vector<8x128xf32>
    tpu.vector_store %arg5[%c0_16, %c0_17], %25 {strides = array<i32>} : memref<8x128xf32, #tpu.memory_space<vmem>>, vector<8x128xf32>,
    %c0_18 = arith.constant 0 : index
    %c0_19 = arith.constant 0 : index
    %27 = vector.load %arg6[%c0_18, %c0_19] : memref<8x128xf32, #tpu.memory_space<vmem>>, vector<8x128xf32>
    %28 = arith.addf %20, %22 : vector<8x128xf32>
    %29 = arith.addf %27, %28 : vector<8x128xf32>
    %c0_20 = arith.constant 0 : index
    %c0_21 = arith.constant 0 : index
    %30 = vector.load %arg6[%c0_20, %c0_21] : memref<8x128xf32, #tpu.memory_space<vmem>>, vector<8x128xf32>
    tpu.vector_store %arg6[%c0_20, %c0_21], %29 {strides = array<i32>} : memref<8x128xf32, #tpu.memory_space<vmem>>, vector<8x128xf32>,
    %c2_i32 = arith.constant 2 : i32
    %c0_i32_22 = arith.constant 0 : i32
    %31 = arith.cmpi eq, %arg1, %c0_i32_22 : i32
    %32 = arith.extui %31 : i1 to i32
    %c0_i32_23 = arith.constant 0 : i32
    %33 = arith.cmpi ne, %32, %c0_i32_23 : i32
    scf.if %33 {
      %c0_24 = arith.constant 0 : index
      %c0_25 = arith.constant 0 : index
      %34 = vector.load %arg5[%c0_24, %c0_25] : memref<8x128xf32, #tpu.memory_space<vmem>>, vector<8x128xf32>
      %cst = arith.constant dense<0.000000e+00> : vector<8xf32>
      %35 = vector.multi_reduction <add>, %34, %cst [1] : vector<8x128xf32> to vector<8xf32>
      %36 = vector.shape_cast %35 : vector<8xf32> to vector<8x1xf32>
      %c0_26 = arith.constant 0 : index
      %c0_27 = arith.constant 0 : index
      %37 = vector.load %arg6[%c0_26, %c0_27] : memref<8x128xf32, #tpu.memory_space<vmem>>, vector<8x128xf32>
      %cst_28 = arith.constant dense<0.000000e+00> : vector<8xf32>
      %38 = vector.multi_reduction <add>, %37, %cst_28 [1] : vector<8x128xf32> to vector<8xf32>
      %39 = vector.shape_cast %38 : vector<8xf32> to vector<8x1xf32>
      %cst_29 = arith.constant 2.000000e+00 : f32
      %40 = vector.broadcast %cst_29 : f32 to vector<8x1xf32>
      %41 = arith.mulf %40, %36 : vector<8x1xf32>
      %cst_30 = arith.constant 1.000000e+00 : f32
      %42 = vector.broadcast %cst_30 : f32 to vector<8x1xf32>
      %43 = arith.addf %41, %42 : vector<8x1xf32>
      %cst_31 = arith.constant 1.000000e+00 : f32
      %44 = vector.broadcast %cst_31 : f32 to vector<8x1xf32>
      %45 = arith.addf %39, %44 : vector<8x1xf32>
      %46 = arith.divf %43, %45 : vector<8x1xf32>
      %47 = vector.shape_cast %46 : vector<8x1xf32> to vector<8x1xf32>
      %48 = vector.broadcast %47 : vector<8x1xf32> to vector<8x128xf32>
      %c0_32 = arith.constant 0 : index
      %c0_33 = arith.constant 0 : index
      %49 = vector.load %arg4[%c0_32, %c0_33] : memref<8x128xf32, #tpu.memory_space<vmem>>, vector<8x128xf32>
      tpu.vector_store %arg4[%c0_32, %c0_33], %48 {strides = array<i32>} : memref<8x128xf32, #tpu.memory_space<vmem>>, vector<8x128xf32>,
    } else {
    }
    return
  }
  func.func @transform_0(%arg0: i32, %arg1: i32) -> (i32, i32) {
    %c0_i32 = arith.constant 0 : i32
    return %arg0, %arg1 : i32, i32
  }
  func.func @transform_1(%arg0: i32, %arg1: i32) -> (i32, i32) {
    %c0_i32 = arith.constant 0 : i32
    return %arg0, %arg1 : i32, i32
  }
  func.func @transform_2(%arg0: i32, %arg1: i32) -> (i32, i32) {
    %c0_i32 = arith.constant 0 : i32
    %c0_i32_0 = arith.constant 0 : i32
    return %arg0, %c0_i32 : i32, i32
  }
}

</mosaic_0001>

<llo_original>
// kernel: tpu_custom_call.1
$region0: #{tpu_custom_call.1}
  #allocation0 [shape = 'u32[]', space=smem, size = 0x4, offset = 0x4, fixed_abs, tag = 'smem constant byte address 0x4 - core index']
  #allocation1 [shape = 'u32[144,128]{1,0:T(1,128)}', space=vmem, size = 0x12000, scoped, tag = 'internal scratch']
  #allocation2 [shape = 'f32[8,128]{1,0:T(8,128)}', space=vmem, size = 0x1000, scoped, tag = 'scratch operand']
  #allocation3 [shape = 'f32[8,128]{1,0:T(8,128)}', space=vmem, size = 0x1000, scoped, tag = 'scratch operand']
  %s0 = inlined_call_operand.hbm [shape: f32[8,256], index: 0, kind: input, shape index: {}]
  %s1 = inlined_call_operand.hbm [shape: f32[8,256], index: 1, kind: input, shape index: {}]
  %s2 = inlined_call_operand.hbm [shape: f32[8,128], index: 2, kind: output, shape index: {}]
  %s3 = sld [smem:[#allocation0]]
  $region34: #{tpu_custom_call.1} parent=0
    _
  %s5 = ssub.s32 1, %s3
  %s6 = scalar_select 0, %s5, %s3
  $region1: #{tpu_custom_call.1} parent=0
    #allocation4 [shape = 'u8[8192]{0}', space=vmem, size = 0x2000, scoped, tag = 'input window, operand 0, single buffered']
    #allocation5 [shape = 's32[1]{0}', space=sflag, size = 0x4, scoped, tag = 'scoped memory for tpu_custom_call.1']
    #allocation6 [shape = 's32[1]{0}', space=sflag, size = 0x4, scoped, tag = 'scoped memory for tpu_custom_call.1']
    #allocation7 [shape = 'u8[8192]{0}', space=vmem, size = 0x2000, scoped, tag = 'input window, operand 1, single buffered']
    #allocation8 [shape = 's32[1]{0}', space=sflag, size = 0x4, scoped, tag = 'scoped memory for tpu_custom_call.1']
    #allocation9 [shape = 'u8[4096]{0}', space=vmem, size = 0x1000, scoped, tag = 'output window, operand 0, single buffered']
    %7 = vsyncpa [#allocation5], 0
    %8 = vsyncpa [#allocation8], 0
    %9 = vsyncpa [#allocation6], 0
    // Predicated region
    $region2: #{tpu_custom_call.1} parent=1 // pred_check
      _
    $region3: #{tpu_custom_call.1} parent=1 // pred_check_branch
      %11 = sbr.rel (0) target = $region5
    $region4: #{tpu_custom_call.1} parent=1 // pred_region
      %s13 = ssub.s32 256, 256
      %14 = vsyncadd [#allocation5], %s13
      %s16 = sshll.u32 [#allocation4], 4
      %s17 = int_to_ptr.vmem [resolvable:$true] %s16
      %19 = dma.hbm_to_vmem [thread:$0]  %s0, 256, %s17, [#allocation5]
    $region5: #{tpu_custom_call.1} parent=1 // pred_fallthru
      _
    // Predicated region
    $region6: #{tpu_custom_call.1} parent=1 // pred_check
      _
    $region7: #{tpu_custom_call.1} parent=1 // pred_check_branch
      %21 = sbr.rel (0) target = $region9
    $region8: #{tpu_custom_call.1} parent=1 // pred_region
      %s23 = ssub.s32 256, 256
      %24 = vsyncadd [#allocation8], %s23
      %s26 = sshll.u32 [#allocation7], 4
      %s27 = int_to_ptr.vmem [resolvable:$true] %s26
      %29 = dma.hbm_to_vmem [thread:$0]  %s1, 256, %s27, [#allocation8]
    $region9: #{tpu_custom_call.1} parent=1 // pred_fallthru
      _
    // Predicated region
    $region10: #{tpu_custom_call.1} parent=1 // pred_check
      _
    $region11: #{tpu_custom_call.1} parent=1 // pred_check_branch
      %31 = sbr.rel (0) target = $region13
    $region12: #{tpu_custom_call.1} parent=1 // pred_region
      %32 = dma.done [#allocation5], 256
    $region13: #{tpu_custom_call.1} parent=1 // pred_fallthru
      _
    // Predicated region
    $region14: #{tpu_custom_call.1} parent=1 // pred_check
      _
    $region15: #{tpu_custom_call.1} parent=1 // pred_check_branch
      %34 = sbr.rel (0) target = $region17
    $region16: #{tpu_custom_call.1} parent=1 // pred_region
      %35 = dma.done [#allocation8], 256
    $region17: #{tpu_custom_call.1} parent=1 // pred_fallthru
      _
    %p36 = scmp.eq.s32.totalorder 0, 0
    // Predicated region
    $region18: #{tpu_custom_call.1} parent=1 // pred_check
      %p37 = pneg %p36
    $region19: #{tpu_custom_call.1} parent=1 // pred_check_branch
      %39 = sbr.rel (%p37) target = $region21
    $region20: #{tpu_custom_call.1} parent=1 // pred_region
      %40 = vst [vmem:[#allocation2] sm:$0xff] 0.0
      %41 = vst [vmem:[#allocation3] sm:$0xff] 0.0
    $region21: #{tpu_custom_call.1} parent=1 // pred_fallthru
      _
    %v42 = vld [vmem:[#allocation4] sm:$0xff]
    %v43 = vld [vmem:[#allocation7] sm:$0xff]
    %v44 = vld [vmem:[#allocation2] sm:$0xff]
    %v45 = vmul.f32 %v42, %v43
    %v46 = vadd.f32 %v44, %v45
    %47 = vst [vmem:[#allocation2] sm:$0xff] %v46
    %v48 = vld [vmem:[#allocation3] sm:$0xff]
    %v49 = vadd.f32 %v42, %v43
    %v50 = vadd.f32 %v48, %v49
    %51 = vst [vmem:[#allocation3] sm:$0xff] %v50
    %s52 = scalar_lea.vmem [#allocation4], 8
    %v53 = vld [vmem:[%s52] sm:$0xff]
    %s54 = scalar_lea.vmem [#allocation7], 8
    %v55 = vld [vmem:[%s54] sm:$0xff]
    %v56 = vld [vmem:[#allocation2] sm:$0xff]
    %v57 = vmul.f32 %v53, %v55
    %v58 = vadd.f32 %v56, %v57
    %59 = vst [vmem:[#allocation2] sm:$0xff] %v58
    %v60 = vld [vmem:[#allocation3] sm:$0xff]
    %v61 = vadd.f32 %v53, %v55
    %v62 = vadd.f32 %v60, %v61
    %63 = vst [vmem:[#allocation3] sm:$0xff] %v62
    // Predicated region
    $region22: #{tpu_custom_call.1} parent=1 // pred_check
      %p64 = pneg %p36
    $region23: #{tpu_custom_call.1} parent=1 // pred_check_branch
      %66 = sbr.rel (%p64) target = $region25
    $region24: #{tpu_custom_call.1} parent=1 // pred_region
      %v67 = vld [vmem:[#allocation2] sm:$0xff]
      %68 = vadd.xlane.f32.xlu0 %v67
      %v69 = vpop.xlane.xlu0 %68
      %v70 = vld [vmem:[#allocation3] sm:$0xff]
      %71 = vadd.xlane.f32.xlu0 %v70
      %v72 = vpop.xlane.xlu0 %71
      %v73 = vmul.f32 %v69, 2.0
      %v74 = vadd.f32 %v73, 1.0
      %v75 = vadd.f32 %v72, 1.0
      %v76 = vrcp.pop %v75
      %v77 = vmul.f32 %v74, %v76
      %78 = vst [vmem:[#allocation9] sm:$0xff] %v77
    $region25: #{tpu_custom_call.1} parent=1 // pred_fallthru
      _
    // Predicated region
    $region26: #{tpu_custom_call.1} parent=1 // pred_check
      _
    $region27: #{tpu_custom_call.1} parent=1 // pred_check_branch
      %80 = sbr.rel (0) target = $region29
    $region28: #{tpu_custom_call.1} parent=1 // pred_region
      %s82 = ssub.s32 128, 128
      %83 = vsyncadd [#allocation6], %s82
      %s85 = sshll.u32 [#allocation9], 4
      %s86 = int_to_ptr.vmem [resolvable:$true] %s85
      %88 = dma.vmem_to_hbm [thread:$0]  %s86, 128, %s2, [#allocation6]
    $region29: #{tpu_custom_call.1} parent=1 // pred_fallthru
      _
    // Predicated region
    $region30: #{tpu_custom_call.1} parent=1 // pred_check
      _
    $region31: #{tpu_custom_call.1} parent=1 // pred_check_branch
      %90 = sbr.rel (0) target = $region33
    $region32: #{tpu_custom_call.1} parent=1 // pred_region
      %91 = dma.done [#allocation6], 128
    $region33: #{tpu_custom_call.1} parent=1 // pred_fallthru
      _
    %92 = vsyncpa [#allocation5], 1
    %93 = vsyncpa [#allocation8], 1
    %94 = vsyncpa [#allocation6], 1

</llo_original>
